<compile_context>
chip_gen: v5e
topology: v5e:2x2
jax: 0.10.0
libtpu: 0.0.40
codegen_flags: <defaults>
</compile_context>

<pallas_src>
import math
import functools

import jax
import jax.numpy as jnp
from jax import lax
from jax.experimental import pallas as pl
from jax.experimental.pallas import tpu as pltpu


_NEG_BIG = -1e30  # finite "minus infinity": avoids NaNs on masked entries


def _qkv_proj_kernel(x_ref, w_ref, b_ref, q_ref, kT_ref, v_ref, *, n_head, scale):
    """Fused c_attn projection + head-major relayout for one (batch, seq-tile)."""
    tt, C = x_ref.shape[1], x_ref.shape[2]
    hd = C // n_head
    x = x_ref[0].astype(jnp.bfloat16)                                  # (tt, C)
    qkv = jnp.dot(x, w_ref[...], preferred_element_type=jnp.float32) + b_ref[0]
    q = (qkv[:, 0 * C:1 * C] * scale).astype(jnp.bfloat16)             # scale folded into q
    k = qkv[:, 1 * C:2 * C].astype(jnp.bfloat16)
    v = qkv[:, 2 * C:3 * C].astype(jnp.bfloat16)
    # One-time O(T*C) head-major relayout (replaces per-kv-step transposes).
    q_ref[0] = q.reshape(tt, n_head, hd).transpose(1, 0, 2)            # (h, tt, hd)
    kT_ref[0] = k.T.reshape(n_head, hd, tt)                            # (h, hd, tt) == K^T
    v_ref[0] = v.reshape(tt, n_head, hd).transpose(1, 0, 2)            # (h, tt, hd)


def _flash_attn_kernel(q_ref, kT_ref, v_ref, wp_ref, bp_ref, o_ref,
                       m_scr, l_scr, acc_scr):
    """Flash attention (online softmax) + fused c_proj for one q tile."""
    qi = pl.program_id(1)
    ki = pl.program_id(2)
    n_head, tq, hd = q_ref.shape[1], q_ref.shape[2], q_ref.shape[3]
    tk = v_ref.shape[2]
    C = n_head * hd

    @pl.when(ki == 0)
    def _init():
        m_scr[...] = jnp.full(m_scr.shape, _NEG_BIG, m_scr.dtype)
        l_scr[...] = jnp.zeros_like(l_scr)
        acc_scr[...] = jnp.zeros_like(acc_scr)

    def _update(masked):
        # Batched over heads; K is already (hd, tk) so the RHS is in natural
        # (contract, out) MXU layout. f32 accumulation.
        s = jnp.einsum("hqd,hdk->hqk", q_ref[0], kT_ref[0],
                       preferred_element_type=jnp.float32)             # (h, tq, tk)
        if masked:
            # Diagonal tile only (qi == ki, tq == tk): local lower-triangular mask.
            row = lax.broadcasted_iota(jnp.int32, (tq, tk), 0)
            col = lax.broadcasted_iota(jnp.int32, (tq, tk), 1)
            s = jnp.where((col <= row)[None, :, :], s, _NEG_BIG)
        m_prev = m_scr[...]                                            # (h, tq)
        m_new = jnp.maximum(m_prev, jnp.max(s, axis=-1))               # (h, tq)
        alpha = jnp.exp(m_prev - m_new)                                # f32
        # bf16 exp: EUP supports bf16 on v6e/v7x (exp is the saturating slot at
        # hd ~ 64); running sum / accumulator stay f32.
        p = jnp.exp((s - m_new[:, :, None]).astype(jnp.bfloat16))      # (h, tq, tk) bf16
        l_scr[...] = alpha * l_scr[...] + jnp.sum(p.astype(jnp.float32), axis=-1)
        acc_scr[...] = alpha[:, :, None] * acc_scr[...] + jnp.einsum(
            "hqk,hkd->hqd", p, v_ref[0], preferred_element_type=jnp.float32)
        m_scr[...] = m_new

    # Strictly-below-diagonal tiles: everything is visible, no mask work at all.
    @pl.when(ki < qi)
    def _off_diag():
        _update(masked=False)

    # Diagonal tile: apply the causal mask. Tiles with ki > qi are fully in the
    # future: compute is skipped here AND their K/V DMA is skipped via the
    # clamped index_map in the BlockSpecs.
    @pl.when(ki == qi)
    def _diag():
        _update(masked=True)

    @pl.when(ki == pl.num_programs(2) - 1)
    def _finalize():
        # Deferred softmax normalization (EUP approx reciprocal) + fused c_proj.
        inv_l = pl.reciprocal(l_scr[...], approx=True)                 # (h, tq)
        y = acc_scr[...] * inv_l[:, :, None]                           # (h, tq, hd) f32
        y = jnp.transpose(y, (1, 0, 2)).reshape(tq, C)                 # (tq, C)
        out = jnp.dot(y.astype(wp_ref.dtype), wp_ref[...],
                      preferred_element_type=jnp.float32) + bp_ref[0]
        o_ref[0] = out.astype(o_ref.dtype)
        # TODO(synk): attn/resid dropout are eval-mode identity here.


def _pick_tile(n, cap=256):
    """Largest multiple of 128 that is <= cap and divides n; else n (full extent).

    128-aligned (or full-extent) tiles satisfy the lane-dim constraint of the
    (hd, T)-layout K blocks and keep DMAs/stores lane-dense.
    """
    if n <= cap:
        return n
    t = (cap // 128) * 128
    while t >= 128:
        if n % t == 0:
            return t
        t -= 128
    return n


def causal_self_attention(x, w_attn, b_attn, w_proj, b_proj, n_head, *, seq_tile=256):
    """minGPT CausalSelfAttention forward (eval mode).

    x: (B, T, C); w_attn: (C, 3C) (in, out); b_attn: (3C,); w_proj: (C, C) (in, out);
    b_proj: (C,). NOTE: weights are transposed w.r.t. PyTorch nn.Linear.weight.
    """
    B, T, C = x.shape
    assert C % n_head == 0
    hd = C // n_head
    scale = 1.0 / math.sqrt(hd)

    # MXU operands in bf16; biases stay f32 (added after f32 accumulation).
    w_attn_b = w_attn.astype(jnp.bfloat16)                   # (C, 3C), single operand
    b_attn_f = b_attn.astype(jnp.float32).reshape(1, 3 * C)
    wp = w_proj.astype(jnp.bfloat16)
    bp = b_proj.astype(jnp.float32).reshape(1, C)

    tt = _pick_tile(T, seq_tile)     # seq tile for both kernels
    tq = tk = tt                     # tq == tk keeps the causal tile-skip exact
    assert T % tt == 0
    n_t = T // tt

    # ---- Kernel 1: fused q/k/v projection, head-major outputs ----
    q, kT, v = pl.pallas_call(
        functools.partial(_qkv_proj_kernel, n_head=n_head, scale=scale),
        out_shape=(
            jax.ShapeDtypeStruct((B, n_head, T, hd), jnp.bfloat16),   # Q  (head-major)
            jax.ShapeDtypeStruct((B, n_head, hd, T), jnp.bfloat16),   # K^T (head-major)
            jax.ShapeDtypeStruct((B, n_head, T, hd), jnp.bfloat16),   # V  (head-major)
        ),
        grid_spec=pltpu.PrefetchScalarGridSpec(
            num_scalar_prefetch=0,
            grid=(B, n_t),
            in_specs=[
                pl.BlockSpec((1, tt, C), lambda b, t: (b, t, 0)),      # x (f32, cast in-kernel)
                pl.BlockSpec((C, 3 * C), lambda b, t: (0, 0)),         # c_attn weight (bf16)
                pl.BlockSpec((1, 3 * C), lambda b, t: (0, 0)),         # c_attn bias (f32)
            ],
            out_specs=[
                pl.BlockSpec((1, n_head, tt, hd), lambda b, t: (b, 0, t, 0)),
                pl.BlockSpec((1, n_head, hd, tt), lambda b, t: (b, 0, 0, t)),
                pl.BlockSpec((1, n_head, tt, hd), lambda b, t: (b, 0, t, 0)),
            ],
        ),
        compiler_params=pltpu.CompilerParams(
            dimension_semantics=("parallel", "parallel"),
            vmem_limit_bytes=48 * 1024 * 1024),
    )(x, w_attn_b, b_attn_f)

    # ---- Kernel 2: flash attention + fused output projection ----
    out = pl.pallas_call(
        _flash_attn_kernel,
        out_shape=jax.ShapeDtypeStruct((B, T, C), x.dtype),
        grid_spec=pltpu.PrefetchScalarGridSpec(
            num_scalar_prefetch=0,
            grid=(B, n_t, n_t),
            in_specs=[
                pl.BlockSpec((1, n_head, tq, hd), lambda b, qi, ki: (b, 0, qi, 0)),
                # Clamp the kv block index: causally-dead tiles (ki > qi) alias the
                # already-resident block, so Pallas skips their HBM DMA entirely.
                pl.BlockSpec((1, n_head, hd, tk),
                             lambda b, qi, ki: (b, 0, 0, jnp.minimum(ki, qi))),
                pl.BlockSpec((1, n_head, tk, hd),
                             lambda b, qi, ki: (b, 0, jnp.minimum(ki, qi), 0)),
                pl.BlockSpec((C, C), lambda b, qi, ki: (0, 0)),        # c_proj weight
                pl.BlockSpec((1, C), lambda b, qi, ki: (0, 0)),        # c_proj bias
            ],
            out_specs=pl.BlockSpec((1, tq, C), lambda b, qi, ki: (b, qi, 0)),
            scratch_shapes=[
                pltpu.VMEM((n_head, tq), jnp.float32),       # running max (lane-dense)
                pltpu.VMEM((n_head, tq), jnp.float32),       # running sum (lane-dense)
                pltpu.VMEM((n_head, tq, hd), jnp.float32),   # output accumulator
            ],
        ),
        compiler_params=pltpu.CompilerParams(
            dimension_semantics=("parallel", "parallel", "arbitrary"),
            vmem_limit_bytes=48 * 1024 * 1024),
    )(q, kT, v, wp, bp)
    return out


def reference_attention(x, w_attn, b_attn, w_proj, b_proj, n_head):
    """Plain-JAX f32 reference mirroring the PyTorch forward (eval mode)."""
    B, T, C = x.shape
    hd = C // n_head
    qkv = jnp.einsum("btc,cd->btd", x, w_attn) + b_attn
    q, k, v = jnp.split(qkv, 3, axis=-1)
    q = q.reshape(B, T, n_head, hd).transpose(0, 2, 1, 3)
    k = k.reshape(B, T, n_head, hd).transpose(0, 2, 1, 3)
    v = v.reshape(B, T, n_head, hd).transpose(0, 2, 1, 3)
    att = jnp.einsum("bhqd,bhkd->bhqk", q, k) * (1.0 / math.sqrt(hd))
    mask = jnp.tril(jnp.ones((T, T), dtype=bool))
    att = jnp.where(mask[None, None], att, -jnp.inf)
    att = jax.nn.softmax(att, axis=-1)
    y = jnp.einsum("bhqk,bhkd->bhqd", att, v)
    y = y.transpose(0, 2, 1, 3).reshape(B, T, C)
    return jnp.einsum("btc,cd->btd", y, w_proj) + b_proj


if __name__ == "__main__":
    # Small config consistent with the module: B=2, T(seq)=8, C(n_embd)=32, n_head=4
    B, T, C, n_head = 2, 8, 32, 4

    key = jax.random.PRNGKey(0)
    kx, k1, k2, k3, k4 = jax.random.split(key, 5)

    x = jax.random.normal(kx, (B, T, C), dtype=jnp.float32)
    w_attn = 0.02 * jax.random.normal(k1, (C, 3 * C), dtype=jnp.float32)
    b_attn = 0.02 * jax.random.normal(k2, (3 * C,), dtype=jnp.float32)
    w_proj = 0.02 * jax.random.normal(k3, (C, C), dtype=jnp.float32)
    b_proj = 0.02 * jax.random.normal(k4, (C,), dtype=jnp.float32)

    out = causal_self_attention(x, w_attn, b_attn, w_proj, b_proj, n_head)
    out = jax.block_until_ready(out)

    ref = reference_attention(x, w_attn, b_attn, w_proj, b_proj, n_head)
    assert out.shape == (B, T, C)
    # bf16 MXU operands + bf16 exp + approx reciprocal => bf16-level tolerance.
    max_err = float(jnp.max(jnp.abs(out - ref)))
    assert jnp.allclose(out, ref, atol=1e-2, rtol=1e-2), \
        f"mismatch vs reference (max abs err {max_err})"
    print("KERNEL_OK")
</pallas_src>

<mosaic_0001>
module attributes {stable_mosaic.version = 11 : i64} {
  func.func @_qkv_proj_kernel(%arg0: i32, %arg1: i32, %arg2: memref<1x8x32xf32, #tpu.memory_space<vmem>>, %arg3: memref<32x96xbf16, #tpu.memory_space<vmem>>, %arg4: memref<1x96xf32, #tpu.memory_space<vmem>>, %arg5: memref<1x4x8x8xbf16, #tpu.memory_space<vmem>>, %arg6: memref<1x4x8x8xbf16, #tpu.memory_space<vmem>>, %arg7: memref<1x4x8x8xbf16, #tpu.memory_space<vmem>>) attributes {dimension_semantics = [#tpu.dimension_semantics<parallel>, #tpu.dimension_semantics<parallel>], iteration_bounds = array<i64: 2, 1>, scalar_prefetch = 0 : i64, scratch_operands = 0 : i64, tpu.core_type = #tpu.core_type<tc>, window_params = [{transform_indices = @transform_0, window_bounds = array<i64: 1, 8, 32>}, {pipeline_mode = #tpu.pipeline_mode<synchronous>, transform_indices = @transform_1, window_bounds = array<i64: 32, 96>}, {pipeline_mode = #tpu.pipeline_mode<synchronous>, transform_indices = @transform_2, window_bounds = array<i64: 1, 96>}, {transform_indices = @transform_3, window_bounds = array<i64: 1, 4, 8, 8>}, {transform_indices = @transform_4, window_bounds = array<i64: 1, 4, 8, 8>}, {transform_indices = @transform_5, window_bounds = array<i64: 1, 4, 8, 8>}]} {
    %c0 = arith.constant 0 : index
    %c0_0 = arith.constant 0 : index
    %c0_1 = arith.constant 0 : index
    %0 = vector.load %arg2[%c0, %c0_0, %c0_1] : memref<1x8x32xf32, #tpu.memory_space<vmem>>, vector<1x8x32xf32>
    %1 = vector.shape_cast %0 : vector<1x8x32xf32> to vector<8x32xf32>
    %2 = arith.truncf %1 : vector<8x32xf32> to vector<8x32xbf16>
    %c0_2 = arith.constant 0 : index
    %c0_3 = arith.constant 0 : index
    %3 = vector.load %arg3[%c0_2, %c0_3] : memref<32x96xbf16, #tpu.memory_space<vmem>>, vector<32x96xbf16>
    %cst = arith.constant dense<0.000000e+00> : vector<8x96xf32>
    %4 = tpu.matmul %2, %3, %cst {dimension_numbers = #tpu.dot_dimension_numbers<[1], [0], [0], [1], [0, 0, 1, 1], [], []>} : vector<8x32xbf16>, vector<32x96xbf16>, vector<8x96xf32> -> vector<8x96xf32>
    %c0_4 = arith.constant 0 : index
    %c0_5 = arith.constant 0 : index
    %5 = vector.load %arg4[%c0_4, %c0_5] : memref<1x96xf32, #tpu.memory_space<vmem>>, vector<1x96xf32>
    %6 = vector.shape_cast %5 : vector<1x96xf32> to vector<96xf32>
    %7 = vector.shape_cast %6 : vector<96xf32> to vector<1x96xf32>
    %8 = vector.broadcast %7 : vector<1x96xf32> to vector<8x96xf32>
    %9 = arith.addf %4, %8 : vector<8x96xf32>
    %10 = vector.extract_strided_slice %9 {offsets = [0, 0], sizes = [8, 32], strides = [1, 1]} : vector<8x96xf32> to vector<8x32xf32>
    %cst_6 = arith.constant 0.353553385 : f32
    %11 = vector.broadcast %cst_6 : f32 to vector<8x32xf32>
    %12 = arith.mulf %10, %11 : vector<8x32xf32>
    %13 = arith.truncf %12 : vector<8x32xf32> to vector<8x32xbf16>
    %14 = vector.extract_strided_slice %9 {offsets = [0, 32], sizes = [8, 32], strides = [1, 1]} : vector<8x96xf32> to vector<8x32xf32>
    %15 = arith.truncf %14 : vector<8x32xf32> to vector<8x32xbf16>
    %16 = vector.extract_strided_slice %9 {offsets = [0, 64], sizes = [8, 32], strides = [1, 1]} : vector<8x96xf32> to vector<8x32xf32>
    %17 = arith.truncf %16 : vector<8x32xf32> to vector<8x32xbf16>
    %18 = vector.shape_cast %13 : vector<8x32xbf16> to vector<8x4x8xbf16>
    %19 = tpu.transpose %18, [1, 0, 2] : vector<8x4x8xbf16> -> vector<4x8x8xbf16>
    %c0_7 = arith.constant 0 : index
    %c0_8 = arith.constant 0 : index
    %c0_9 = arith.constant 0 : index
    %c0_10 = arith.constant 0 : index
    %20 = vector.load %arg5[%c0_7, %c0_8, %c0_9, %c0_10] : memref<1x4x8x8xbf16, #tpu.memory_space<vmem>>, vector<1x4x8x8xbf16>
    %21 = vector.shape_cast %20 : vector<1x4x8x8xbf16> to vector<4x8x8xbf16>
    %22 = vector.shape_cast %19 : vector<4x8x8xbf16> to vector<1x4x8x8xbf16>
    tpu.vector_store %arg5[%c0_7, %c0_8, %c0_9, %c0_10], %22 {strides = array<i32>} : memref<1x4x8x8xbf16, #tpu.memory_space<vmem>>, vector<1x4x8x8xbf16>,
    %23 = tpu.transpose %15, [1, 0] : vector<8x32xbf16> -> vector<32x8xbf16>
    %24 = vector.shape_cast %23 : vector<32x8xbf16> to vector<4x8x8xbf16>
    %c0_11 = arith.constant 0 : index
    %c0_12 = arith.constant 0 : index
    %c0_13 = arith.constant 0 : index
    %c0_14 = arith.constant 0 : index
    %25 = vector.load %arg6[%c0_11, %c0_12, %c0_13, %c0_14] : memref<1x4x8x8xbf16, #tpu.memory_space<vmem>>, vector<1x4x8x8xbf16>
    %26 = vector.shape_cast %25 : vector<1x4x8x8xbf16> to vector<4x8x8xbf16>
    %27 = vector.shape_cast %24 : vector<4x8x8xbf16> to vector<1x4x8x8xbf16>
    tpu.vector_store %arg6[%c0_11, %c0_12, %c0_13, %c0_14], %27 {strides = array<i32>} : memref<1x4x8x8xbf16, #tpu.memory_space<vmem>>, vector<1x4x8x8xbf16>,
    %28 = vector.shape_cast %17 : vector<8x32xbf16> to vector<8x4x8xbf16>
    %29 = tpu.transpose %28, [1, 0, 2] : vector<8x4x8xbf16> -> vector<4x8x8xbf16>
    %c0_15 = arith.constant 0 : index
    %c0_16 = arith.constant 0 : index
    %c0_17 = arith.constant 0 : index
    %c0_18 = arith.constant 0 : index
    %30 = vector.load %arg7[%c0_15, %c0_16, %c0_17, %c0_18] : memref<1x4x8x8xbf16, #tpu.memory_space<vmem>>, vector<1x4x8x8xbf16>
    %31 = vector.shape_cast %30 : vector<1x4x8x8xbf16> to vector<4x8x8xbf16>
    %32 = vector.shape_cast %29 : vector<4x8x8xbf16> to vector<1x4x8x8xbf16>
    tpu.vector_store %arg7[%c0_15, %c0_16, %c0_17, %c0_18], %32 {strides = array<i32>} : memref<1x4x8x8xbf16, #tpu.memory_space<vmem>>, vector<1x4x8x8xbf16>,
    return
  }
  func.func @transform_0(%arg0: i32, %arg1: i32) -> (i32, i32, i32) {
    %c0_i32 = arith.constant 0 : i32
    %c0_i32_0 = arith.constant 0 : i32
    return %arg0, %arg1, %c0_i32 : i32, i32, i32
  }
  func.func @transform_1(%arg0: i32, %arg1: i32) -> (i32, i32) {
    %c0_i32 = arith.constant 0 : i32
    %c0_i32_0 = arith.constant 0 : i32
    %c0_i32_1 = arith.constant 0 : i32
    return %c0_i32, %c0_i32_0 : i32, i32
  }
  func.func @transform_2(%arg0: i32, %arg1: i32) -> (i32, i32) {
    %c0_i32 = arith.constant 0 : i32
    %c0_i32_0 = arith.constant 0 : i32
    %c0_i32_1 = arith.constant 0 : i32
    return %c0_i32, %c0_i32_0 : i32, i32
  }
  func.func @transform_3(%arg0: i32, %arg1: i32) -> (i32, i32, i32, i32) {
    %c0_i32 = arith.constant 0 : i32
    %c0_i32_0 = arith.constant 0 : i32
    %c0_i32_1 = arith.constant 0 : i32
    return %arg0, %c0_i32, %arg1, %c0_i32_0 : i32, i32, i32, i32
  }
  func.func @transform_4(%arg0: i32, %arg1: i32) -> (i32, i32, i32, i32) {
    %c0_i32 = arith.constant 0 : i32
    %c0_i32_0 = arith.constant 0 : i32
    %c0_i32_1 = arith.constant 0 : i32
    return %arg0, %c0_i32, %c0_i32_0, %arg1 : i32, i32, i32, i32
  }
  func.func @transform_5(%arg0: i32, %arg1: i32) -> (i32, i32, i32, i32) {
    %c0_i32 = arith.constant 0 : i32
    %c0_i32_0 = arith.constant 0 : i32
    %c0_i32_1 = arith.constant 0 : i32
    return %arg0, %c0_i32, %arg1, %c0_i32_0 : i32, i32, i32, i32
  }
}

</mosaic_0001>

<llo_original>
// kernel: tpu_custom_call.1
$region0: #{tpu_custom_call.1}
  #allocation0 [shape = 'u32[]', space=smem, size = 0x4, offset = 0x4, fixed_abs, tag = 'smem constant byte address 0x4 - core index']
  #allocation1 [shape = 'u32[72,128]{1,0:T(1,128)}', space=vmem, size = 0x9000, scoped, tag = 'internal scratch']
  %s0 = inlined_call_operand.hbm [shape: f32[2,8,32], index: 0, kind: input, shape index: {}]
  %s1 = inlined_call_operand.hbm [shape: bf16[32,96], index: 1, kind: input, shape index: {}]
  %s2 = inlined_call_operand.vmem [shape: f32[1,96], index: 2, kind: input, shape index: {}]
  %s3 = inlined_call_operand.hbm [shape: bf16[2,4,8,8], index: 3, kind: output, shape index: {0}]
  %s4 = inlined_call_operand.hbm [shape: bf16[2,4,8,8], index: 4, kind: output, shape index: {1}]
  %s5 = inlined_call_operand.hbm [shape: bf16[2,4,8,8], index: 5, kind: output, shape index: {2}]
  %6 = xla_tuple %s3, %s4, %s5
  %s7 = sld [smem:[#allocation0]]
  $region69: #{tpu_custom_call.1} parent=0
    _
  %s9 = ssub.s32 1, %s7
  %s10 = scalar_select 0, %s9, %s7
  $region1: #{tpu_custom_call.1} parent=0
    #allocation2 [shape = 'u8[8192]{0}', space=vmem, size = 0x2000, scoped, tag = 'input window, operand 0']
    #allocation3 [shape = 's32[2]{0}', space=sflag, size = 0x8, scoped, tag = 'scoped memory for tpu_custom_call.1']
    #allocation4 [shape = 's32[2]{0}', space=sflag, size = 0x8, scoped, tag = 'scoped memory for tpu_custom_call.1']
    #allocation5 [shape = 'u8[8192]{0}', space=vmem, size = 0x2000, scoped, tag = 'input window, operand 1, single buffered']
    #allocation6 [shape = 's32[1]{0}', space=sflag, size = 0x4, scoped, tag = 'scoped memory for tpu_custom_call.1']
    #allocation7 [shape = 'u8[16384]{0}', space=vmem, size = 0x4000, scoped, tag = 'output window, operand 0']
    #allocation8 [shape = 'u8[16384]{0}', space=vmem, size = 0x4000, scoped, tag = 'output window, operand 1']
    #allocation9 [shape = 's32[2]{0}', space=sflag, size = 0x8, scoped, tag = 'scoped memory for tpu_custom_call.1']
    #allocation10 [shape = 'u8[16384]{0}', space=vmem, size = 0x4000, scoped, tag = 'output window, operand 2']
    %11 = vsyncpa [#allocation3], 0
    %s12 = scalar_lea.sflag [#allocation3], 1
    %13 = vsyncpa %s12, 0
    %14 = vsyncpa [#allocation6], 0
    %15 = vsyncpa [#allocation4], 0
    %s16 = scalar_lea.sflag [#allocation4], 1
    %17 = vsyncpa %s16, 0
    %18 = vsyncpa [#allocation9], 0
    %s19 = scalar_lea.sflag [#allocation9], 1
    %20 = vsyncpa %s19, 0
    loop: start=0, step=1, limit=4
    $region2: #{tpu_custom_call.1} parent=1 // loop_pre_header
      _
    $region3: #{tpu_custom_call.1} parent=1 // loop_header
      %s22 = sphi 0, %s26
      %p23 = scmp.ge.s32.totalorder %s22, 4
      %s29 = sphi 0, %s41
      %s30 = sphi 0, %s37
      %s31 = sphi 0, %s29
      %s32 = sphi 0, %s30
      %s33 = sphi 0, %s31
      %s34 = sphi 0, %s32
      %s46 = sphi 0, %s48
      %s49 = sphi 0, %s46
      %s50 = sphi 0, %s49
      %s66 = sphi 0, %s50
      %s70 = sphi 0, %s70
      %s72 = sphi 0, %s70
      %s73 = sphi 0, %s72
      %s87 = sphi 0, %s73
      %s91 = sphi 0, %s91
      %s93 = sphi 0, %s91
      %s94 = sphi 0, %s93
      %s108 = sphi 0, %s94
      %s116 = sphi 0, %s118
      %s119 = sphi 0, %s116
      %s120 = sphi 0, %s119
      %s136 = sphi 0, %s120
      %s144 = sphi 0, %s146
      %s147 = sphi 0, %s144
      %s148 = sphi 0, %s147
      %s164 = sphi 0, %s148
      %s172 = sphi 0, %s174
      %s175 = sphi 0, %s172
      %s176 = sphi 0, %s175
      %s192 = sphi 0, %s176
    $region4: #{tpu_custom_call.1} parent=1 // loop_header_branch
      %25 = sbr.rel (%p23) target = $region8
    $region5: #{tpu_custom_call.1} parent=1 // loop_body
      %s27 = ssub.s32 %s22, 1
      %s28 = ssub.s32 %s22, 2
      %s35 = sadd.s32 1, %s30
      %p36 = scmp.ge.s32.totalorder %s35, 1
      %s37 = scalar_select %p36, 0, %s35
      %s38 = sadd.s32 1, %s29
      %s39 = scalar_select %p36, %s38, %s29
      %p40 = scmp.ge.s32.totalorder %s39, 2
      %s41 = scalar_select %p40, 0, %s39
      %s42 = ssub.s32 %s29, %s41
      %s43 = ssub.s32 %s30, %s37
      %s44 = sor.u32 %s42, %s43
      %p45 = scmp.eq.s32.totalorder %s44, 0
      %s47 = sadd.s32 %s46, 1
      %s48 = scalar_select %p45, %s46, %s47
      %p51 = pneg %p45
      %p52 = scmp.eq.s32.totalorder %s22, 1
      %p53 = por %p51, %p52
      %p54 = scmp.ne.s32.totalorder %s46, %s49
      %p55 = scmp.eq.s32.totalorder %s22, 0
      %p56 = por %p54, %p55
      %p57 = scmp.ne.s32.totalorder %s46, %s49
      %p58 = scmp.eq.s32.totalorder %s27, 1
      %p59 = por %p57, %p58
      %p60 = scmp.ne.s32.totalorder %s49, %s50
      %p61 = scmp.eq.s32.totalorder %s27, 0
      %p62 = por %p60, %p61
      %p63 = scmp.ne.s32.totalorder %s49, %s50
      %p64 = scmp.eq.s32.totalorder %s28, 1
      %p65 = por %p63, %p64
      %p67 = scmp.ne.s32.totalorder %s50, %s66
      %p68 = scmp.eq.s32.totalorder %s28, 0
      %p69 = por %p67, %p68
      %s71 = sadd.s32 %s70, 1
      %p74 = scmp.eq.s32.totalorder %s22, 1
      %p75 = scmp.ne.s32.totalorder %s70, %s72
      %p76 = scmp.eq.s32.totalorder %s22, 0
      %p77 = por %p75, %p76
      %p78 = scmp.ne.s32.totalorder %s70, %s72
      %p79 = scmp.eq.s32.totalorder %s27, 1
      %p80 = por %p78, %p79
      %p81 = scmp.ne.s32.totalorder %s72, %s73
      %p82 = scmp.eq.s32.totalorder %s27, 0
      %p83 = por %p81, %p82
      %p84 = scmp.ne.s32.totalorder %s72, %s73
      %p85 = scmp.eq.s32.totalorder %s28, 1
      %p86 = por %p84, %p85
      %p88 = scmp.ne.s32.totalorder %s73, %s87
      %p89 = scmp.eq.s32.totalorder %s28, 0
      %p90 = por %p88, %p89
      %s92 = sadd.s32 %s91, 1
      %p95 = scmp.eq.s32.totalorder %s22, 1
      %p96 = scmp.ne.s32.totalorder %s91, %s93
      %p97 = scmp.eq.s32.totalorder %s22, 0
      %p98 = por %p96, %p97
      %p99 = scmp.ne.s32.totalorder %s91, %s93
      %p100 = scmp.eq.s32.totalorder %s27, 1
      %p101 = por %p99, %p100
      %p102 = scmp.ne.s32.totalorder %s93, %s94
      %p103 = scmp.eq.s32.totalorder %s27, 0
      %p104 = por %p102, %p103
      %p105 = scmp.ne.s32.totalorder %s93, %s94
      %p106 = scmp.eq.s32.totalorder %s28, 1
      %p107 = por %p105, %p106
      %p109 = scmp.ne.s32.totalorder %s94, %s108
      %p110 = scmp.eq.s32.totalorder %s28, 0
      %p111 = por %p109, %p110
      %s112 = ssub.s32 %s29, %s41
      %s113 = ssub.s32 %s30, %s37
      %s114 = sor.u32 %s112, %s113
      %p115 = scmp.eq.s32.totalorder %s114, 0
      %s117 = sadd.s32 %s116, 1
      %s118 = scalar_select %p115, %s116, %s117
      %p121 = pneg %p115
      %p122 = scmp.eq.s32.totalorder %s22, 1
      %p123 = por %p121, %p122
      %p124 = scmp.ne.s32.totalorder %s116, %s119
      %p125 = scmp.eq.s32.totalorder %s22, 0
      %p126 = por %p124, %p125
      %p127 = scmp.ne.s32.totalorder %s116, %s119
      %p128 = scmp.eq.s32.totalorder %s27, 1
      %p129 = por %p127, %p128
      %p130 = scmp.ne.s32.totalorder %s119, %s120
      %p131 = scmp.eq.s32.totalorder %s27, 0
      %p132 = por %p130, %p131
      %p133 = scmp.ne.s32.totalorder %s119, %s120
      %p134 = scmp.eq.s32.totalorder %s28, 1
      %p135 = por %p133, %p134
      %p137 = scmp.ne.s32.totalorder %s120, %s136
      %p138 = scmp.eq.s32.totalorder %s28, 0
      %p139 = por %p137, %p138
      %s140 = ssub.s32 %s29, %s41
      %s141 = ssub.s32 %s30, %s37
      %s142 = sor.u32 %s140, %s141
      %p143 = scmp.eq.s32.totalorder %s142, 0
      %s145 = sadd.s32 %s144, 1
      %s146 = scalar_select %p143, %s144, %s145
      %p149 = pneg %p143
      %p150 = scmp.eq.s32.totalorder %s22, 1
      %p151 = por %p149, %p150
      %p152 = scmp.ne.s32.totalorder %s144, %s147
      %p153 = scmp.eq.s32.totalorder %s22, 0
      %p154 = por %p152, %p153
      %p155 = scmp.ne.s32.totalorder %s144, %s147
      %p156 = scmp.eq.s32.totalorder %s27, 1
      %p157 = por %p155, %p156
      %p158 = scmp.ne.s32.totalorder %s147, %s148
      %p159 = scmp.eq.s32.totalorder %s27, 0
      %p160 = por %p158, %p159
      %p161 = scmp.ne.s32.totalorder %s147, %s148
      %p162 = scmp.eq.s32.totalorder %s28, 1
      %p163 = por %p161, %p162
      %p165 = scmp.ne.s32.totalorder %s148, %s164
      %p166 = scmp.eq.s32.totalorder %s28, 0
      %p167 = por %p165, %p166
      %s168 = ssub.s32 %s29, %s41
      %s169 = ssub.s32 %s30, %s37
      %s170 = sor.u32 %s168, %s169
      %p171 = scmp.eq.s32.totalorder %s170, 0
      %s173 = sadd.s32 %s172, 1
      %s174 = scalar_select %p171, %s172, %s173
      %p177 = pneg %p171
      %p178 = scmp.eq.s32.totalorder %s22, 1
      %p179 = por %p177, %p178
      %p180 = scmp.ne.s32.totalorder %s172, %s175
      %p181 = scmp.eq.s32.totalorder %s22, 0
      %p182 = por %p180, %p181
      %p183 = scmp.ne.s32.totalorder %s172, %s175
      %p184 = scmp.eq.s32.totalorder %s27, 1
      %p185 = por %p183, %p184
      %p186 = scmp.ne.s32.totalorder %s175, %s176
      %p187 = scmp.eq.s32.totalorder %s27, 0
      %p188 = por %p186, %p187
      %p189 = scmp.ne.s32.totalorder %s175, %s176
      %p190 = scmp.eq.s32.totalorder %s28, 1
      %p191 = por %p189, %p190
      %p193 = scmp.ne.s32.totalorder %s176, %s192
      %p194 = scmp.eq.s32.totalorder %s28, 0
      %p195 = por %p193, %p194
      %p196 = scmp.le.s32.totalorder 1, %s22
      %p197 = scmp.lt.s32.totalorder %s22, 3
      %p198 = pnand %p196, %p197
      %p199 = pneg %p198
      // Predicated region
      $region9: #{tpu_custom_call.1} parent=5 // pred_check
        _
      $region10: #{tpu_custom_call.1} parent=5 // pred_check_branch
        %201 = sbr.rel (%p198) target = $region12
      $region11: #{tpu_custom_call.1} parent=5 // pred_region
        %s202 = ssub.s32 %s22, 1
        // Predicated region
        $region13: #{tpu_custom_call.1} parent=11 // pred_check
          %p203 = pneg %p83
        $region14: #{tpu_custom_call.1} parent=11 // pred_check_branch
          %205 = sbr.rel (%p203) target = $region16
        $region15: #{tpu_custom_call.1} parent=11 // pred_region
          %207 = vsyncadd [#allocation6], 0
          %s208 = sshll.u32 %s1, 4
          %s209 = int_to_ptr.hbm [resolvable:$true] %s208
          %s210 = sshll.u32 [#allocation5], 4
          %s211 = int_to_ptr.vmem [resolvable:$true] %s210
          %216 = dma.hbm_to_vmem [thread:$0]  %s209, 256, %s211, [#allocation6], 64, 64, 4
        $region16: #{tpu_custom_call.1} parent=11 // pred_fallthru
          _
        // Predicated region
        $region17: #{tpu_custom_call.1} parent=11 // pred_check
          %p217 = pneg %p104
        $region18: #{tpu_custom_call.1} parent=11 // pred_check_branch
          %219 = sbr.rel (%p217) target = $region20
        $region19: #{tpu_custom_call.1} parent=11 // pred_region
          _
        $region20: #{tpu_custom_call.1} parent=11 // pred_fallthru
          _
      $region12: #{tpu_custom_call.1} parent=5 // pred_fallthru
        _
      %p220 = scmp.lt.s32.totalorder %s22, 2
      // Predicated region
      $region21: #{tpu_custom_call.1} parent=5 // pred_check
        %p221 = pneg %p220
      $region22: #{tpu_custom_call.1} parent=5 // pred_check_branch
        %223 = sbr.rel (%p221) target = $region24
      $region23: #{tpu_custom_call.1} parent=5 // pred_region
        // Predicated region
        $region25: #{tpu_custom_call.1} parent=23 // pred_check
          %p224 = pneg %p56
        $region26: #{tpu_custom_call.1} parent=23 // pred_check_branch
          %226 = sbr.rel (%p224) target = $region28
        $region27: #{tpu_custom_call.1} parent=23 // pred_region
          %s227 = sand.u32 %s46, 1
          %s228 = scalar_lea.sflag [#allocation3], %s227
          %s229 = sand.u32 %s46, 1
          %s230 = smul.addr %s229, 8
          %s231 = scalar_lea.vmem [#allocation2], %s230
          %233 = vsyncadd %s228, 0
          %s234 = sadd.s32 %s30, %s29
          %s235 = smul.addr %s234, 8
          %s236 = scalar_lea.hbm %s0, %s235
          %s238 = sshll.u32 %s236, 4
          %s239 = int_to_ptr.hbm [resolvable:$true] %s238
          %s240 = sshll.u32 %s231, 4
          %s241 = int_to_ptr.vmem [resolvable:$true] %s240
          %243 = dma.hbm_to_vmem [thread:$0]  %s239, 128, %s241, %s228
        $region28: #{tpu_custom_call.1} parent=23 // pred_fallthru
          _
      $region24: #{tpu_custom_call.1} parent=5 // pred_fallthru
        _
      %p244 = scmp.le.s32.totalorder 1, %s22
      %p245 = scmp.lt.s32.totalorder %s22, 3
      %p246 = pnand %p244, %p245
      %p247 = pneg %p246
      // Predicated region
      $region29: #{tpu_custom_call.1} parent=5 // pred_check
        _
      $region30: #{tpu_custom_call.1} parent=5 // pred_check_branch
        %249 = sbr.rel (%p246) target = $region32
      $region31: #{tpu_custom_call.1} parent=5 // pred_region
        %s250 = ssub.s32 %s22, 1
        %s251 = sand.u32 %s49, 1
        %s252 = scalar_lea.sflag [#allocation3], %s251
        %s253 = sand.u32 %s49, 1
        %s254 = smul.addr %s253, 8
        %s255 = scalar_lea.vmem [#allocation2], %s254
        // Predicated region
        $region33: #{tpu_custom_call.1} parent=31 // pred_check
          %p256 = pneg %p62
        $region34: #{tpu_custom_call.1} parent=31 // pred_check_branch
          %258 = sbr.rel (%p256) target = $region36
        $region35: #{tpu_custom_call.1} parent=31 // pred_region
          %260 = dma.done %s252, 128
        $region36: #{tpu_custom_call.1} parent=31 // pred_fallthru
          _
        // Predicated region
        $region37: #{tpu_custom_call.1} parent=31 // pred_check
          %p261 = pneg %p83
        $region38: #{tpu_custom_call.1} parent=31 // pred_check_branch
          %263 = sbr.rel (%p261) target = $region40
        $region39: #{tpu_custom_call.1} parent=31 // pred_region
          %265 = dma.done [#allocation6], 256
        $region40: #{tpu_custom_call.1} parent=31 // pred_fallthru
          _
        %s266 = sand.u32 %s49, 1
        %s267 = scalar_lea.sflag [#allocation3], %s266
        %s268 = sand.u32 %s49, 1
        %s269 = smul.addr %s268, 8
        %s270 = scalar_lea.vmem [#allocation2], %s269
        %p271 = pneg %p62
        %p272 = pneg %p59
        %p273 = pneg %p83
        %p274 = pneg %p80
        %p275 = pneg %p104
        %p276 = pneg %p101
        %p277 = pneg %p132
        %p278 = pneg %p129
        %s279 = sand.u32 %s119, 1
        %s280 = scalar_lea.sflag [#allocation4], %s279
        %s281 = sand.u32 %s119, 1
        %s282 = smul.addr %s281, 16
        %s283 = scalar_lea.vmem [#allocation7], %s282
        %p284 = pneg %p160
        %p285 = pneg %p157
        %s286 = sand.u32 %s27, 1
        %s287 = scalar_lea.sflag [#allocation9], %s286
        %s288 = sand.u32 %s147, 1
        %s289 = smul.addr %s288, 16
        %s290 = scalar_lea.vmem [#allocation8], %s289
        %p291 = pneg %p188
        %p292 = pneg %p185
        %s293 = sand.u32 %s27, 1
        %s294 = scalar_lea.sflag [#allocation9], %s293
        %s295 = sand.u32 %s175, 1
        %s296 = smul.addr %s295, 16
        %s297 = scalar_lea.vmem [#allocation10], %s296
        %v299 = vld [vmem:[%s255] sm:$0xff]
        %v300 = vpack.c.bf16 %v299, %v299
        %v301 = vld [vmem:[#allocation5] sm:$0xf]
        %v302 = vld [vmem:[#allocation5 + $0x4] sm:$0xf]
        %v303 = vld [vmem:[#allocation5 + $0x8] sm:$0xf]
        %v304 = vld [vmem:[#allocation5 + $0xc] sm:$0xf]
        %v305 = vld [vmem:[%s2] sm:$0x1]
        %v307 = vperm.slane %v305, 0
        %v313 = vunpack.c.l.b16 %v301
        %v314 = vunpack.c.l.b16 %v302
        %v315 = vunpack.c.l.b16 %v303
        %v316 = vunpack.c.l.b16 %v304
        %v317 = vpack.c.b16 %v314, %v313
        %v318 = vpack.c.b16 %v316, %v315
        %vm321 = vcmask 261120
        %v323 = vsel %vm321, %v300, 0
        %325 = vmatpush.bf16.msra.mxu0 0
        %326 = vmatpush.bf16.msra.mxu0 0
        %327 = vmatpush.bf16.msra.mxu0 0
        %328 = vmatpush.bf16.msra.mxu0 0
        %329 = vmatpush.bf16.msra.mxu0 0
        %330 = vmatpush.bf16.msra.mxu0 0
        %331 = vmatpush.bf16.msra.mxu0 %v318
        %332 = vmatpush.bf16.msra.mxu0 %v317
        %333 = vmatmul.bf16.gmra.mxu0 %v323
        %v334 = vpop.f32.mrf.mxu0
        %v335 = vadd.f32 %v307, %v334
        %v336 = vpop.f32.mrf.mxu0
        %337 = vdwg.mxu0
        %v338 = vmul.f32 %v335, 0.35355338
        %v339 = vpack.c.bf16 %v338, %v338
        %v340 = vpack.c.bf16 %v335, %v335
        %342 = vrot.lane.b32.xlu0 %v339, 120
        %v343 = vpop.permute.xlu0 %342
        %344 = vrot.lane.b32.xlu0 %v339, 112
        %v345 = vpop.permute.xlu0 %344
        %346 = vrot.lane.b32.xlu0 %v339, 104
        %v347 = vpop.permute.xlu0 %346
        %v350 = vpack.i.b16 %v343, %v339
        %v351 = vshrl.u32 %v339, 16
        %v352 = vshrl.u32 %v343, 16
        %v353 = vpack.i.b16 %v352, %v351
        %v356 = vpack.i.b16 %v347, %v345
        %v357 = vshrl.u32 %v345, 16
        %v358 = vshrl.u32 %v347, 16
        %v359 = vpack.i.b16 %v358, %v357
        %v362 = vunpack.c.l.s4 1983009808
        %v363 = vunpack.c.0.s8 %v362
        %v364 = vperm.slane %v350, %v363
        %v367 = vunpack.c.l.s4 1983009808
        %v368 = vunpack.c.0.s8 %v367
        %v369 = vperm.slane %v356, %v368
        %v370 = vrot.slane %v369, 4
        %vm371 = vcmask 1047556
        %v372 = vsel %vm371, %v370, %v364
        %v373 = vrot.slane %v364, 4
        %v374 = vsel %vm371, %v369, %v373
        %v376 = vunpack.c.l.s4 1934713408
        %v377 = vunpack.c.0.s8 %v376
        %v378 = vperm.slane %v372, %v377
        %v380 = vunpack.c.l.s4 1934713408
        %v381 = vunpack.c.0.s8 %v380
        %v382 = vperm.slane %v374, %v381
        %v383 = vrot.slane %v378, 4
        %v384 = vsel %vm371, 0, %v383
        %v385 = vrot.slane %v382, 4
        %v386 = vsel %vm371, 0, %v385
        %v389 = vunpack.c.l.s4 1983009808
        %v390 = vunpack.c.0.s8 %v389
        %v391 = vperm.slane %v353, %v390
        %v394 = vunpack.c.l.s4 1983009808
        %v395 = vunpack.c.0.s8 %v394
        %v396 = vperm.slane %v359, %v395
        %v397 = vrot.slane %v396, 4
        %v398 = vsel %vm371, %v397, %v391
        %v399 = vrot.slane %v391, 4
        %v400 = vsel %vm371, %v396, %v399
        %v402 = vunpack.c.l.s4 1934713408
        %v403 = vunpack.c.0.s8 %v402
        %v404 = vperm.slane %v398, %v403
        %v406 = vunpack.c.l.s4 1934713408
        %v407 = vunpack.c.0.s8 %v406
        %v408 = vperm.slane %v400, %v407
        %v409 = vrot.slane %v404, 4
        %v410 = vsel %vm371, 0, %v409
        %v411 = vrot.slane %v408, 4
        %v412 = vsel %vm371, 0, %v411
        %v413 = vsel %vm371, %v385, %v378
        %v415 = vunpack.c.l.s4 1983009808
        %v416 = vunpack.c.0.s8 %v415
        %v417 = vperm.slane %v413, %v416
        %v418 = vrot.slane %v386, 4
        %v419 = vsel %vm371, %v418, %v384
        %v421 = vunpack.c.l.s4 1983009808
        %v422 = vunpack.c.0.s8 %v421
        %v423 = vperm.slane %v419, %v422
        %v424 = vrot.slane %v423, 4
        %v425 = vsel %vm371, %v424, %v417
        %v427 = vunpack.c.l.s4 1934713408
        %v428 = vunpack.c.0.s8 %v427
        %v429 = vperm.slane %v425, %v428
        %v430 = vrot.slane %v429, 4
        %v431 = vsel %vm371, 0, %v430
        %v432 = vsel %vm371, %v411, %v404
        %v434 = vunpack.c.l.s4 1983009808
        %v435 = vunpack.c.0.s8 %v434
        %v436 = vperm.slane %v432, %v435
        %v437 = vrot.slane %v412, 4
        %v438 = vsel %vm371, %v437, %v410
        %v440 = vunpack.c.l.s4 1983009808
        %v441 = vunpack.c.0.s8 %v440
        %v442 = vperm.slane %v438, %v441
        %v443 = vrot.slane %v442, 4
        %v444 = vsel %vm371, %v443, %v436
        %v446 = vunpack.c.l.s4 1934713408
        %v447 = vunpack.c.0.s8 %v446
        %v448 = vperm.slane %v444, %v447
        %v449 = vrot.slane %v448, 4
        %v450 = vsel %vm371, 0, %v449
        %v453 = vpack.i.b16 %v448, %v429
        %v455 = vshrl.u32 %v429, 16
        %v456 = vshrl.u32 %v448, 16
        %v457 = vpack.i.b16 %v456, %v455
        %v461 = vpack.i.b16 %v450, %v431
        %v463 = vshrl.u32 %v431, 16
        %v464 = vshrl.u32 %v450, 16
        %v465 = vpack.i.b16 %v464, %v463
        %vm467 = vcmask 60416
        %468 = vst.msk [vmem:[%s283] sm:$0xf] %vm467, %v453
        %469 = vst.msk [vmem:[%s283 + $0x4] sm:$0xf] %vm467, %v457
        %470 = vst.msk [vmem:[%s283 + $0x8] sm:$0xf] %vm467, %v461
        %471 = vst.msk [vmem:[%s283 + $0xc] sm:$0xf] %vm467, %v465
        %473 = vrot.lane.b32.xlu0 %v340, 96
        %v474 = vpop.permute.xlu0 %473
        %476 = vxpose.xlu0.c.b16.start [1/8] %v474, 128
        %477 = vxpose.xlu0.c.b16.cont [2/8] 0, 128
        %478 = vxpose.xlu0.c.b16.cont [3/8] 0, 128
        %479 = vxpose.xlu0.c.b16.cont [4/8] 0, 128
        %480 = vxpose.xlu0.c.b16.cont [5/8] 0, 128
        %481 = vxpose.xlu0.c.b16.cont [6/8] 0, 128
        %482 = vxpose.xlu0.c.b16.cont [7/8] 0, 128
        %483 = vxpose.xlu0.c.b16.end [8/8] 0, 128
        %v484 = vpop.trf.xlu0
        %v485 = vpop.trf.xlu0
        %v486 = vpop.trf.xlu0
        %v487 = vpop.trf.xlu0
        %v488 = vpop.trf.xlu0
        %v489 = vpop.trf.xlu0
        %v490 = vpop.trf.xlu0
        %v491 = vpop.trf.xlu0
        %v494 = vunpack.c.l.b16 %v484
        %v495 = vunpack.c.h.b16 %v484
        %v496 = vunpack.c.l.b16 %v485
        %v497 = vunpack.c.h.b16 %v485
        %v498 = vpack.c.b16 %v494, %v494
        %v499 = vpack.c.b16 %v495, %v495
        %v500 = vpack.c.b16 %v496, %v496
        %v501 = vpack.c.b16 %v497, %v497
        %506 = vst.msk [vmem:[%s290] sm:$0xf] %vm467, %v498
        %507 = vst.msk [vmem:[%s290 + $0x4] sm:$0xf] %vm467, %v499
        %508 = vst.msk [vmem:[%s290 + $0x8] sm:$0xf] %vm467, %v500
        %509 = vst.msk [vmem:[%s290 + $0xc] sm:$0xf] %vm467, %v501
        %510 = vrot.lane.b32.xlu0 %v340, 120
        %v511 = vpop.permute.xlu0 %510
        %512 = vrot.lane.b32.xlu0 %v340, 112
        %v513 = vpop.permute.xlu0 %512
        %514 = vrot.lane.b32.xlu0 %v340, 104
        %v515 = vpop.permute.xlu0 %514
        %516 = vrot.lane.b32.xlu0 %v340, 64
        %v517 = vpop.permute.xlu0 %516
        %518 = vrot.lane.b32.xlu0 %v511, 64
        %v519 = vpop.permute.xlu0 %518
        %520 = vrot.lane.b32.xlu0 %v513, 64
        %v521 = vpop.permute.xlu0 %520
        %522 = vrot.lane.b32.xlu0 %v515, 64
        %v523 = vpop.permute.xlu0 %522
        %v526 = vpack.i.b16 %v519, %v517
        %v527 = vshrl.u32 %v517, 16
        %v528 = vshrl.u32 %v519, 16
        %v529 = vpack.i.b16 %v528, %v527
        %v532 = vpack.i.b16 %v523, %v521
        %v533 = vshrl.u32 %v521, 16
        %v534 = vshrl.u32 %v523, 16
        %v535 = vpack.i.b16 %v534, %v533
        %v538 = vunpack.c.l.s4 1983009808
        %v539 = vunpack.c.0.s8 %v538
        %v540 = vperm.slane %v526, %v539
        %v543 = vunpack.c.l.s4 1983009808
        %v544 = vunpack.c.0.s8 %v543
        %v545 = vperm.slane %v532, %v544
        %v546 = vrot.slane %v545, 4
        %v547 = vsel %vm371, %v546, %v540
        %v548 = vrot.slane %v540, 4
        %v549 = vsel %vm371, %v545, %v548
        %v551 = vunpack.c.l.s4 1934713408
        %v552 = vunpack.c.0.s8 %v551
        %v553 = vperm.slane %v547, %v552
        %v555 = vunpack.c.l.s4 1934713408
        %v556 = vunpack.c.0.s8 %v555
        %v557 = vperm.slane %v549, %v556
        %v558 = vrot.slane %v553, 4
        %v559 = vsel %vm371, 0, %v558
        %v560 = vrot.slane %v557, 4
        %v561 = vsel %vm371, 0, %v560
        %v564 = vunpack.c.l.s4 1983009808
        %v565 = vunpack.c.0.s8 %v564
        %v566 = vperm.slane %v529, %v565
        %v569 = vunpack.c.l.s4 1983009808
        %v570 = vunpack.c.0.s8 %v569
        %v571 = vperm.slane %v535, %v570
        %v572 = vrot.slane %v571, 4
        %v573 = vsel %vm371, %v572, %v566
        %v574 = vrot.slane %v566, 4
        %v575 = vsel %vm371, %v571, %v574
        %v577 = vunpack.c.l.s4 1934713408
        %v578 = vunpack.c.0.s8 %v577
        %v579 = vperm.slane %v573, %v578
        %v581 = vunpack.c.l.s4 1934713408
        %v582 = vunpack.c.0.s8 %v581
        %v583 = vperm.slane %v575, %v582
        %v584 = vrot.slane %v579, 4
        %v585 = vsel %vm371, 0, %v584
        %v586 = vrot.slane %v583, 4
        %v587 = vsel %vm371, 0, %v586
        %v588 = vsel %vm371, %v560, %v553
        %v590 = vunpack.c.l.s4 1983009808
        %v591 = vunpack.c.0.s8 %v590
        %v592 = vperm.slane %v588, %v591
        %v593 = vrot.slane %v561, 4
        %v594 = vsel %vm371, %v593, %v559
        %v596 = vunpack.c.l.s4 1983009808
        %v597 = vunpack.c.0.s8 %v596
        %v598 = vperm.slane %v594, %v597
        %v599 = vrot.slane %v598, 4
        %v600 = vsel %vm371, %v599, %v592
        %v602 = vunpack.c.l.s4 1934713408
        %v603 = vunpack.c.0.s8 %v602
        %v604 = vperm.slane %v600, %v603
        %v605 = vrot.slane %v604, 4
        %v606 = vsel %vm371, 0, %v605
        %v607 = vsel %vm371, %v586, %v579
        %v609 = vunpack.c.l.s4 1983009808
        %v610 = vunpack.c.0.s8 %v609
        %v611 = vperm.slane %v607, %v610
        %v612 = vrot.slane %v587, 4
        %v613 = vsel %vm371, %v612, %v585
        %v615 = vunpack.c.l.s4 1983009808
        %v616 = vunpack.c.0.s8 %v615
        %v617 = vperm.slane %v613, %v616
        %v618 = vrot.slane %v617, 4
        %v619 = vsel %vm371, %v618, %v611
        %v621 = vunpack.c.l.s4 1934713408
        %v622 = vunpack.c.0.s8 %v621
        %v623 = vperm.slane %v619, %v622
        %v624 = vrot.slane %v623, 4
        %v625 = vsel %vm371, 0, %v624
        %v628 = vpack.i.b16 %v623, %v604
        %v630 = vshrl.u32 %v604, 16
        %v631 = vshrl.u32 %v623, 16
        %v632 = vpack.i.b16 %v631, %v630
        %v636 = vpack.i.b16 %v625, %v606
        %v638 = vshrl.u32 %v606, 16
        %v639 = vshrl.u32 %v625, 16
        %v640 = vpack.i.b16 %v639, %v638
        %642 = vst.msk [vmem:[%s297] sm:$0xf] %vm467, %v628
        %643 = vst.msk [vmem:[%s297 + $0x4] sm:$0xf] %vm467, %v632
        %644 = vst.msk [vmem:[%s297 + $0x8] sm:$0xf] %vm467, %v636
        %645 = vst.msk [vmem:[%s297 + $0xc] sm:$0xf] %vm467, %v640
        %s646 = sand.u32 %s119, 1
        %s647 = scalar_lea.sflag [#allocation4], %s646
        %s648 = sand.u32 %s119, 1
        %s649 = smul.addr %s648, 16
        %s650 = scalar_lea.vmem [#allocation7], %s649
        %s651 = sand.u32 %s27, 1
        %s652 = scalar_lea.sflag [#allocation9], %s651
        %s653 = sand.u32 %s147, 1
        %s654 = smul.addr %s653, 16
        %s655 = scalar_lea.vmem [#allocation8], %s654
        %s656 = sand.u32 %s27, 1
        %s657 = scalar_lea.sflag [#allocation9], %s656
        %s658 = sand.u32 %s175, 1
        %s659 = smul.addr %s658, 16
        %s660 = scalar_lea.vmem [#allocation10], %s659
        // Predicated region
        $region41: #{tpu_custom_call.1} parent=31 // pred_check
          %p661 = pneg %p129
        $region42: #{tpu_custom_call.1} parent=31 // pred_check_branch
          %663 = sbr.rel (%p661) target = $region44
        $region43: #{tpu_custom_call.1} parent=31 // pred_region
          %665 = vsyncadd %s647, 0
          %s666 = smul.addr %s31, 4
          %s667 = sadd.s32 %s32, %s666
          %s668 = smul.addr %s667, 4
          %s669 = scalar_lea.hbm %s3, %s668
          %s670 = sshll.u32 %s650, 4
          %s671 = int_to_ptr.vmem [resolvable:$true] %s670
          %s672 = sshll.u32 %s669, 4
          %s673 = int_to_ptr.hbm [resolvable:$true] %s672
          %678 = dma.vmem_to_hbm [thread:$0]  %s671, 256, %s673, %s647, 64, 64, 4
        $region44: #{tpu_custom_call.1} parent=31 // pred_fallthru
          _
        // Predicated region
        $region45: #{tpu_custom_call.1} parent=31 // pred_check
          %p679 = pneg %p157
        $region46: #{tpu_custom_call.1} parent=31 // pred_check_branch
          %681 = sbr.rel (%p679) target = $region48
        $region47: #{tpu_custom_call.1} parent=31 // pred_region
          %683 = vsyncadd %s652, 0
          %s684 = smul.addr %s31, 4
          %s685 = sadd.s32 %s32, %s684
          %s686 = smul.addr %s685, 4
          %s687 = scalar_lea.hbm %s4, %s686
          %s688 = sshll.u32 %s655, 4
          %s689 = int_to_ptr.vmem [resolvable:$true] %s688
          %s690 = sshll.u32 %s687, 4
          %s691 = int_to_ptr.hbm [resolvable:$true] %s690
          %696 = dma.vmem_to_hbm [thread:$0]  %s689, 256, %s691, %s652, 64, 64, 4
        $region48: #{tpu_custom_call.1} parent=31 // pred_fallthru
          _
        // Predicated region
        $region49: #{tpu_custom_call.1} parent=31 // pred_check
          %p697 = pneg %p185
        $region50: #{tpu_custom_call.1} parent=31 // pred_check_branch
          %699 = sbr.rel (%p697) target = $region52
        $region51: #{tpu_custom_call.1} parent=31 // pred_region
          %701 = vsyncadd %s657, 0
          %s702 = smul.addr %s31, 4
          %s703 = sadd.s32 %s32, %s702
          %s704 = smul.addr %s703, 4
          %s705 = scalar_lea.hbm %s5, %s704
          %s706 = sshll.u32 %s660, 4
          %s707 = int_to_ptr.vmem [resolvable:$true] %s706
          %s708 = sshll.u32 %s705, 4
          %s709 = int_to_ptr.hbm [resolvable:$true] %s708
          %714 = dma.vmem_to_hbm [thread:$0]  %s707, 256, %s709, %s657, 64, 64, 4
        $region52: #{tpu_custom_call.1} parent=31 // pred_fallthru
          _
      $region32: #{tpu_custom_call.1} parent=5 // pred_fallthru
        _
      %p715 = scmp.le.s32.totalorder 2, %s22
      // Predicated region
      $region53: #{tpu_custom_call.1} parent=5 // pred_check
        %p716 = pneg %p715
      $region54: #{tpu_custom_call.1} parent=5 // pred_check_branch
        %718 = sbr.rel (%p716) target = $region56
      $region55: #{tpu_custom_call.1} parent=5 // pred_region
        %s719 = ssub.s32 %s22, 2
        // Predicated region
        $region57: #{tpu_custom_call.1} parent=55 // pred_check
          %p720 = pneg %p135
        $region58: #{tpu_custom_call.1} parent=55 // pred_check_branch
          %722 = sbr.rel (%p720) target = $region60
        $region59: #{tpu_custom_call.1} parent=55 // pred_region
          %s723 = sand.u32 %s120, 1
          %s724 = scalar_lea.sflag [#allocation4], %s723
          %s725 = sand.u32 %s120, 1
          %s726 = smul.addr %s725, 16
          %s727 = scalar_lea.vmem [#allocation7], %s726
          %729 = dma.done %s724, 256
        $region60: #{tpu_custom_call.1} parent=55 // pred_fallthru
          _
        // Predicated region
        $region61: #{tpu_custom_call.1} parent=55 // pred_check
          %p730 = pneg %p163
        $region62: #{tpu_custom_call.1} parent=55 // pred_check_branch
          %732 = sbr.rel (%p730) target = $region64
        $region63: #{tpu_custom_call.1} parent=55 // pred_region
          %s733 = sand.u32 %s28, 1
          %s734 = scalar_lea.sflag [#allocation9], %s733
          %s735 = sand.u32 %s148, 1
          %s736 = smul.addr %s735, 16
          %s737 = scalar_lea.vmem [#allocation8], %s736
          %739 = dma.done %s734, 256
        $region64: #{tpu_custom_call.1} parent=55 // pred_fallthru
          _
        // Predicated region
        $region65: #{tpu_custom_call.1} parent=55 // pred_check
          %p740 = pneg %p191
        $region66: #{tpu_custom_call.1} parent=55 // pred_check_branch
          %742 = sbr.rel (%p740) target = $region68
        $region67: #{tpu_custom_call.1} parent=55 // pred_region
          %s743 = sand.u32 %s28, 1
          %s744 = scalar_lea.sflag [#allocation9], %s743
          %s745 = sand.u32 %s176, 1
          %s746 = smul.addr %s745, 16
          %s747 = scalar_lea.vmem [#allocation10], %s746
          %749 = dma.done %s744, 256
        $region68: #{tpu_custom_call.1} parent=55 // pred_fallthru
          _
      $region56: #{tpu_custom_call.1} parent=5 // pred_fallthru
        _
    $region6: #{tpu_custom_call.1} parent=1 // loop_footer
      %s26 = sadd.s32 1, %s22
    $region7: #{tpu_custom_call.1} parent=1 // loop_footer_branch
      %21 = sbr.rel target = $region3
    $region8: #{tpu_custom_call.1} parent=1 // loop_exit
      _
    %750 = vsyncpa [#allocation3], 1
    %s751 = scalar_lea.sflag [#allocation3], 1
    %752 = vsyncpa %s751, 1
    %753 = vsyncpa [#allocation6], 1
    %754 = vsyncpa [#allocation4], 1
    %s755 = scalar_lea.sflag [#allocation4], 1
    %756 = vsyncpa %s755, 1
    %757 = vsyncpa [#allocation9], 1
    %s758 = scalar_lea.sflag [#allocation9], 1
    %759 = vsyncpa %s758, 1

</llo_original>
